<compile_context>
chip_gen: v5e
topology: v5e:2x2
jax: 0.10.0
libtpu: 0.0.40
codegen_flags: <defaults>
</compile_context>

<pallas_src>
import jax
import jax.numpy as jnp
from jax.experimental import pallas as pl
from jax.experimental.pallas import tpu as pltpu

KERNEL_SIZE = 1          # nn.AvgPool2d(1)
STRIDE = KERNEL_SIZE     # PyTorch default: stride = kernel_size

MAX_TILE_ROWS = 512      # sublane-dim tile (multiple of 8)
MAX_LANE_WIDTH = 1024    # lane-dim width (multiple of 128)


def _avgpool_k1_copy_kernel(x_ref, o_ref):
    # For a 1x1 window with stride 1 the per-window sum is the pixel itself and
    # 1/(k*k) == 1.0, so the body is a bare copy (no upcast, no scale).
    # TODO(synk): kernel_size > 1 would need a real windowed spatial reduction
    # with strided output; the module under test fixes kernel_size = 1.
    o_ref[...] = x_ref[...]


def avg_pool2d_k1(x):
    """x: (N, C, H, W). Returns nn.AvgPool2d(kernel_size=1)(x) (same shape)."""
    assert KERNEL_SIZE == 1 and STRIDE == 1
    N, C, H, W = x.shape
    total = N * C * H * W

    # ---- choose a lane-dense 2D layout -------------------------------------
    # Lane width: largest multiple of 128 (capped at MAX_LANE_WIDTH) dividing
    # the flattened size; fall back to 128 (with row padding) otherwise.
    lane = 128
    cand = MAX_LANE_WIDTH
    while cand >= 128:
        if total % cand == 0:
            lane = cand
            break
        cand //= 2

    rows = pl.cdiv(total, lane)

    # Row tile: as large as possible while double-buffered in + out stays well
    # inside the smallest scoped-VMEM budget across v5e/v6e/v7x.
    if rows <= MAX_TILE_ROWS:
        tile_rows = rows               # block == full rows dim (always legal)
        grid_rows = 1
    else:
        tile_rows = MAX_TILE_ROWS      # multiple of 8
        grid_rows = pl.cdiv(rows, tile_rows)

    padded_rows = grid_rows * tile_rows
    padded_total = padded_rows * lane

    flat = x.reshape(-1)
    if padded_total != total:
        flat = jnp.pad(flat, (0, padded_total - total))
    x2d = flat.reshape(padded_rows, lane)

    y2d = pl.pallas_call(
        _avgpool_k1_copy_kernel,
        out_shape=jax.ShapeDtypeStruct((padded_rows, lane), x.dtype),
        grid=(grid_rows,),
        in_specs=[pl.BlockSpec((tile_rows, lane), lambda r: (r, 0))],
        out_specs=pl.BlockSpec((tile_rows, lane), lambda r: (r, 0)),
        compiler_params=pltpu.CompilerParams(
            # Single mem-bound axis; "parallel" lets v7x shard across both TCs.
            dimension_semantics=("parallel",),
            # <=2 MiB tiles, double-buffered in+out -> ~8 MiB; explicit headroom
            # that is still valid on v7x's 64 MiB physical VMEM.
            vmem_limit_bytes=32 * 1024 * 1024,
        ),
    )(x2d)

    return y2d.reshape(-1)[:total].reshape(N, C, H, W)


if __name__ == "__main__":
    key = jax.random.PRNGKey(0)
    # Small NCHW input consistent with the module's forward.
    x = jax.random.normal(key, (2, 4, 16, 16), dtype=jnp.float32)

    y = avg_pool2d_k1(x)
    y = jax.block_until_ready(y)

    # AvgPool2d(1) is the identity; the lane-dense copy must be bit-exact.
    assert y.shape == x.shape
    assert bool(jnp.array_equal(y, x)), "AvgPool2d(1) should equal the input"

    print("KERNEL_OK")
</pallas_src>

<mosaic_0001>
module attributes {stable_mosaic.version = 11 : i64} {
  func.func @_avgpool_k1_copy_kernel(%arg0: i32, %arg1: memref<2x1024xf32, #tpu.memory_space<vmem>>, %arg2: memref<2x1024xf32, #tpu.memory_space<vmem>>) attributes {dimension_semantics = [#tpu.dimension_semantics<parallel>], iteration_bounds = array<i64: 1>, scalar_prefetch = 0 : i64, scratch_operands = 0 : i64, tpu.core_type = #tpu.core_type<tc>, window_params = [{transform_indices = @transform_0, window_bounds = array<i64: 2, 1024>}, {transform_indices = @transform_1, window_bounds = array<i64: 2, 1024>}]} {
    %c0 = arith.constant 0 : index
    %c0_0 = arith.constant 0 : index
    %0 = vector.load %arg1[%c0, %c0_0] : memref<2x1024xf32, #tpu.memory_space<vmem>>, vector<2x1024xf32>
    %c0_1 = arith.constant 0 : index
    %c0_2 = arith.constant 0 : index
    %1 = vector.load %arg2[%c0_1, %c0_2] : memref<2x1024xf32, #tpu.memory_space<vmem>>, vector<2x1024xf32>
    tpu.vector_store %arg2[%c0_1, %c0_2], %0 {strides = array<i32>} : memref<2x1024xf32, #tpu.memory_space<vmem>>, vector<2x1024xf32>,
    return
  }
  func.func @transform_0(%arg0: i32) -> (i32, i32) {
    %c0_i32 = arith.constant 0 : i32
    %c0_i32_0 = arith.constant 0 : i32
    return %arg0, %c0_i32 : i32, i32
  }
  func.func @transform_1(%arg0: i32) -> (i32, i32) {
    %c0_i32 = arith.constant 0 : i32
    %c0_i32_0 = arith.constant 0 : i32
    return %arg0, %c0_i32 : i32, i32
  }
}

</mosaic_0001>

<llo_original>
// kernel: tpu_custom_call.1
$region0: #{tpu_custom_call.1}
  #allocation0 [shape = 'u32[]', space=smem, size = 0x4, offset = 0x4, fixed_abs, tag = 'smem constant byte address 0x4 - core index']
  #allocation1 [shape = 'u32[72,128]{1,0:T(1,128)}', space=vmem, size = 0x9000, scoped, tag = 'internal scratch']
  %s0 = inlined_call_operand.hbm [shape: f32[2,1024], index: 0, kind: input, shape index: {}]
  %s1 = inlined_call_operand.hbm [shape: f32[2,1024], index: 1, kind: output, shape index: {}]
  %s2 = sld [smem:[#allocation0]]
  $region18: #{tpu_custom_call.1} parent=0
    _
  %s4 = ssub.s32 1, %s2
  %s5 = scalar_select 0, %s4, %s2
  $region1: #{tpu_custom_call.1} parent=0
    #allocation2 [shape = 'u8[8192]{0}', space=vmem, size = 0x2000, scoped, tag = 'input window, operand 0, single buffered']
    #allocation3 [shape = 's32[1]{0}', space=sflag, size = 0x4, scoped, tag = 'scoped memory for tpu_custom_call.1']
    #allocation4 [shape = 's32[1]{0}', space=sflag, size = 0x4, scoped, tag = 'scoped memory for tpu_custom_call.1']
    #allocation5 [shape = 'u8[8192]{0}', space=vmem, size = 0x2000, scoped, tag = 'output window, operand 0, single buffered']
    %6 = vsyncpa [#allocation3], 0
    %7 = vsyncpa [#allocation4], 0
    // Predicated region
    $region2: #{tpu_custom_call.1} parent=1 // pred_check
      _
    $region3: #{tpu_custom_call.1} parent=1 // pred_check_branch
      %9 = sbr.rel (0) target = $region5
    $region4: #{tpu_custom_call.1} parent=1 // pred_region
      %11 = vsyncadd [#allocation3], 0
      %s13 = sshll.u32 %s0, 4
      %s14 = int_to_ptr.hbm [resolvable:$true] %s13
      %s15 = sshll.u32 [#allocation2], 4
      %s16 = int_to_ptr.vmem [resolvable:$true] %s15
      %18 = dma.hbm_to_vmem [thread:$0]  %s14, 256, %s16, [#allocation3]
    $region5: #{tpu_custom_call.1} parent=1 // pred_fallthru
      _
    // Predicated region
    $region6: #{tpu_custom_call.1} parent=1 // pred_check
      _
    $region7: #{tpu_custom_call.1} parent=1 // pred_check_branch
      %20 = sbr.rel (0) target = $region9
    $region8: #{tpu_custom_call.1} parent=1 // pred_region
      %22 = dma.done [#allocation3], 256
    $region9: #{tpu_custom_call.1} parent=1 // pred_fallthru
      _
    %v23 = vld [vmem:[#allocation2] sm:$0xff]
    %v24 = vld [vmem:[#allocation2 + $0x8] sm:$0xff]
    %25 = vst [vmem:[#allocation5] sm:$0xff] %v23
    %26 = vst [vmem:[#allocation5 + $0x8] sm:$0xff] %v24
    // Predicated region
    $region10: #{tpu_custom_call.1} parent=1 // pred_check
      _
    $region11: #{tpu_custom_call.1} parent=1 // pred_check_branch
      %28 = sbr.rel (0) target = $region13
    $region12: #{tpu_custom_call.1} parent=1 // pred_region
      %30 = vsyncadd [#allocation4], 0
      %s32 = sshll.u32 [#allocation5], 4
      %s33 = int_to_ptr.vmem [resolvable:$true] %s32
      %s34 = sshll.u32 %s1, 4
      %s35 = int_to_ptr.hbm [resolvable:$true] %s34
      %37 = dma.vmem_to_hbm [thread:$0]  %s33, 256, %s35, [#allocation4]
    $region13: #{tpu_custom_call.1} parent=1 // pred_fallthru
      _
    // Predicated region
    $region14: #{tpu_custom_call.1} parent=1 // pred_check
      _
    $region15: #{tpu_custom_call.1} parent=1 // pred_check_branch
      %39 = sbr.rel (0) target = $region17
    $region16: #{tpu_custom_call.1} parent=1 // pred_region
      %41 = dma.done [#allocation4], 256
    $region17: #{tpu_custom_call.1} parent=1 // pred_fallthru
      _
    %42 = vsyncpa [#allocation3], 1
    %43 = vsyncpa [#allocation4], 1

</llo_original>
